<compile_context>
chip_gen: v7x
topology: tpu7x:2x2x1
jax: 0.10.0
libtpu: 0.0.40
codegen_flags: <defaults>
</compile_context>

<pallas_src>
import functools

import jax
import jax.numpy as jnp
from jax.experimental import pallas as pl
from jax.experimental.pallas import tpu as pltpu


def _nucleo_pos_kernel(seed_ref, ids_ref, emb_ref, pe_ref, out_ref, *,
                       p, train, num_nucleotides):
    """seed_ref: SMEM (1,) int32      (scalar prefetch)
       ids_ref:  VMEM (tb, S*D) int32 (token id repeated D times along the lane axis)
       emb_ref:  VMEM (V,  S*D) f32   (embedding table tiled S times along the lane axis)
       pe_ref:   VMEM (1,  S*D) f32   (positional-encoding matrix, flattened)
       out_ref:  VMEM (tb, S*D) f32
    """
    ids = ids_ref[...]                                  # (tb, S*D) int32
    tb, sd = out_ref.shape

    # Embedding gather: V-way select chain on the VPU (V is tiny, e.g. 4).
    # Out-of-range ids produce a zero embedding row (PyTorch nn.Embedding would error).
    x = jnp.zeros((tb, sd), dtype=jnp.float32)
    for v in range(num_nucleotides):
        x = jnp.where(ids == v, emb_ref[v:v + 1, :], x)

    # Positional encoding (broadcast over the batch-row / sublane axis).
    x = x + pe_ref[...]

    # Dropout (training semantics: drop w.p. p, scale survivors by 1/(1-p)).
    if train and p > 0.0:
        row0 = pl.program_id(0) * tb                    # global first row of this tile
        r = (jax.lax.broadcasted_iota(jnp.int32, (tb, sd), 0) + row0).astype(jnp.uint32)
        c = jax.lax.broadcasted_iota(jnp.int32, (tb, sd), 1).astype(jnp.uint32)
        ctr = r * jnp.uint32(sd) + c                    # globally unique per element
        # lowbias32-style integer hash, mixed with the user seed (VPU-only ops).
        h = ctr ^ (seed_ref[0].astype(jnp.uint32) * jnp.uint32(0x9E3779B9))
        h = h ^ (h >> 16)
        h = h * jnp.uint32(0x7FEB352D)
        h = h ^ (h >> 15)
        h = h * jnp.uint32(0x846CA68B)
        h = h ^ (h >> 16)
        thresh = jnp.uint32(min(int(p * 4294967296.0), 4294967295))
        keep = h >= thresh
        x = jnp.where(keep, x * jnp.float32(1.0 / (1.0 - p)), jnp.float32(0.0))

    out_ref[...] = x.astype(out_ref.dtype)


def make_pe_matrix(seq_len, embed_dim, dtype=jnp.float32):
    """Same construction as the PyTorch buffer PE_matrix, shape (seq_len, embed_dim)."""
    base_pow = 10000.0
    i_num = jnp.arange(0.0, seq_len, dtype=jnp.float32).reshape(-1, 1)        # (S, 1)
    j_denom = jnp.power(
        base_pow, jnp.arange(0.0, embed_dim, 2.0, dtype=jnp.float32) / embed_dim
    )                                                                          # (D/2,)
    angles = i_num / j_denom                                                   # (S, D/2)
    pe = jnp.zeros((seq_len, embed_dim), dtype=jnp.float32)
    pe = pe.at[:, 0::2].set(jnp.sin(angles))
    pe = pe.at[:, 1::2].set(jnp.cos(angles))
    return pe.astype(dtype)


def _pick_row_tile(n_rows, lane_width, max_tile_bytes=2 * 1024 * 1024):
    """Largest batch-row tile that divides n_rows, is a multiple of 8 (sublane rule)
    or equals n_rows, and keeps one f32 tile buffer <= max_tile_bytes (so double-
    buffered in+out stays well inside the v7x 64 MiB VMEM budget)."""
    max_rows = max(1, max_tile_bytes // (lane_width * 4))
    if n_rows <= max_rows:
        return n_rows
    for t in range(min(n_rows, max_rows), 0, -1):
        if n_rows % t == 0 and t % 8 == 0:
            return t
    return n_rows


def nucleo_pos_encoding(ids, emb_table, pe_matrix, *, pdropout=0.1, train=True, seed=0):
    """ids: (B, S) int; emb_table: (V, D) f32; pe_matrix: (S, D) f32 -> (B, S, D) f32."""
    B, S = ids.shape
    V, D = emb_table.shape
    SD = S * D

    # Glue: lane-dense layouts prepared outside the kernel.
    ids_exp = jnp.repeat(ids.astype(jnp.int32), D, axis=1)        # (B, S*D)
    emb_tiled = jnp.tile(emb_table.astype(jnp.float32), (1, S))   # (V, S*D)
    pe_flat = pe_matrix.astype(jnp.float32).reshape(1, SD)        # (1, S*D)
    seed_arr = jnp.array([seed], dtype=jnp.int32)

    tb = _pick_row_tile(B, SD)
    grid = (B // tb,)

    kernel = functools.partial(
        _nucleo_pos_kernel, p=float(pdropout), train=bool(train), num_nucleotides=int(V)
    )

    grid_spec = pltpu.PrefetchScalarGridSpec(
        num_scalar_prefetch=1,
        grid=grid,
        in_specs=[
            pl.BlockSpec((tb, SD), lambda i, seed_ref: (i, 0)),   # ids (lane-dense, tiled)
            pl.BlockSpec((V, SD), lambda i, seed_ref: (0, 0)),    # emb table (resident)
            pl.BlockSpec((1, SD), lambda i, seed_ref: (0, 0)),    # PE matrix (resident)
        ],
        out_specs=pl.BlockSpec((tb, SD), lambda i, seed_ref: (i, 0)),
    )

    out2d = pl.pallas_call(
        kernel,
        out_shape=jax.ShapeDtypeStruct((B, SD), jnp.float32),
        grid_spec=grid_spec,
        compiler_params=pltpu.CompilerParams(
            dimension_semantics=("parallel",),          # megacore sharding on v7x
            vmem_limit_bytes=32 * 1024 * 1024,
        ),
    )(seed_arr, ids_exp, emb_tiled, pe_flat)

    return out2d.reshape(B, S, D)


if __name__ == "__main__":
    # Module config (kept small): num_nucleotides=4, seq_len=16, embed_dim=32, batch=2.
    num_nucleotides = 4
    seq_len = 16
    embed_dim = 32
    batch = 2
    pdropout = 0.1

    key = jax.random.PRNGKey(0)
    k_ids, k_emb = jax.random.split(key)

    # Deterministic parameter init (nn.Embedding default ~ N(0, 1)).
    emb_table = jax.random.normal(k_emb, (num_nucleotides, embed_dim), dtype=jnp.float32)
    pe_matrix = make_pe_matrix(seq_len, embed_dim)
    ids = jax.random.randint(k_ids, (batch, seq_len), 0, num_nucleotides, dtype=jnp.int32)

    # Eval mode (dropout = identity): exact check vs plain-JAX reference.
    out_eval = jax.block_until_ready(
        nucleo_pos_encoding(ids, emb_table, pe_matrix, pdropout=pdropout, train=False)
    )
    ref = emb_table[ids] + pe_matrix[None, :, :]
    assert out_eval.shape == (batch, seq_len, embed_dim)
    assert jnp.allclose(out_eval, ref, atol=1e-5, rtol=1e-5)

    # Train mode: every element must be either 0 (dropped) or ref/(1-p) (kept, scaled).
    out_train = jax.block_until_ready(
        nucleo_pos_encoding(ids, emb_table, pe_matrix, pdropout=pdropout, train=True, seed=42)
    )
    assert out_train.shape == (batch, seq_len, embed_dim)
    scaled = ref / (1.0 - pdropout)
    elem_ok = jnp.isclose(out_train, 0.0, atol=1e-6) | jnp.isclose(
        out_train, scaled, atol=1e-4, rtol=1e-4
    )
    assert bool(jnp.all(elem_ok))
    keep_frac = float(jnp.mean((out_train != 0.0).astype(jnp.float32)))
    assert 0.7 < keep_frac < 0.98, f"unexpected keep fraction {keep_frac}"

    print("KERNEL_OK")
</pallas_src>

<mosaic_0001>
module attributes {stable_mosaic.version = 11 : i64} {
  func.func @_nucleo_pos_kernel(%arg0: i32, %arg1: memref<1xi32, #tpu.memory_space<smem>>, %arg2: memref<2x512xi32, #tpu.memory_space<vmem>>, %arg3: memref<4x512xf32, #tpu.memory_space<vmem>>, %arg4: memref<1x512xf32, #tpu.memory_space<vmem>>, %arg5: memref<2x512xf32, #tpu.memory_space<vmem>>) attributes {dimension_semantics = [#tpu.dimension_semantics<parallel>], iteration_bounds = array<i64: 1>, scalar_prefetch = 1 : i64, scratch_operands = 0 : i64, tpu.core_type = #tpu.core_type<tc>, window_params = [{transform_indices = @transform_0, window_bounds = array<i64: 2, 512>}, {pipeline_mode = #tpu.pipeline_mode<synchronous>, transform_indices = @transform_1, window_bounds = array<i64: 4, 512>}, {pipeline_mode = #tpu.pipeline_mode<synchronous>, transform_indices = @transform_2, window_bounds = array<i64: 1, 512>}, {transform_indices = @transform_3, window_bounds = array<i64: 2, 512>}]} {
    %c0 = arith.constant 0 : index
    %c0_0 = arith.constant 0 : index
    %0 = vector.load %arg2[%c0, %c0_0] : memref<2x512xi32, #tpu.memory_space<vmem>>, vector<2x512xi32>
    %cst = arith.constant 0.000000e+00 : f32
    %1 = vector.broadcast %cst : f32 to vector<2x512xf32>
    %c0_i32 = arith.constant 0 : i32
    %2 = vector.broadcast %c0_i32 : i32 to vector<2x512xi32>
    %3 = arith.cmpi eq, %0, %2 : vector<2x512xi32>
    %c0_1 = arith.constant 0 : index
    %c0_2 = arith.constant 0 : index
    %4 = vector.load %arg3[%c0_1, %c0_2] : memref<4x512xf32, #tpu.memory_space<vmem>>, vector<1x512xf32>
    %5 = vector.shape_cast %4 : vector<1x512xf32> to vector<1x512xf32>
    %6 = vector.broadcast %5 : vector<1x512xf32> to vector<2x512xf32>
    %7 = arith.select %3, %6, %1 : vector<2x512xi1>, vector<2x512xf32>
    %c1_i32 = arith.constant 1 : i32
    %8 = vector.broadcast %c1_i32 : i32 to vector<2x512xi32>
    %9 = arith.cmpi eq, %0, %8 : vector<2x512xi32>
    %c1 = arith.constant 1 : index
    %c0_3 = arith.constant 0 : index
    %10 = vector.load %arg3[%c1, %c0_3] : memref<4x512xf32, #tpu.memory_space<vmem>>, vector<1x512xf32>
    %11 = vector.shape_cast %10 : vector<1x512xf32> to vector<1x512xf32>
    %12 = vector.broadcast %11 : vector<1x512xf32> to vector<2x512xf32>
    %13 = arith.select %9, %12, %7 : vector<2x512xi1>, vector<2x512xf32>
    %c2_i32 = arith.constant 2 : i32
    %14 = vector.broadcast %c2_i32 : i32 to vector<2x512xi32>
    %15 = arith.cmpi eq, %0, %14 : vector<2x512xi32>
    %c2 = arith.constant 2 : index
    %c0_4 = arith.constant 0 : index
    %16 = vector.load %arg3[%c2, %c0_4] : memref<4x512xf32, #tpu.memory_space<vmem>>, vector<1x512xf32>
    %17 = vector.shape_cast %16 : vector<1x512xf32> to vector<1x512xf32>
    %18 = vector.broadcast %17 : vector<1x512xf32> to vector<2x512xf32>
    %19 = arith.select %15, %18, %13 : vector<2x512xi1>, vector<2x512xf32>
    %c3_i32 = arith.constant 3 : i32
    %20 = vector.broadcast %c3_i32 : i32 to vector<2x512xi32>
    %21 = arith.cmpi eq, %0, %20 : vector<2x512xi32>
    %c3 = arith.constant 3 : index
    %c0_5 = arith.constant 0 : index
    %22 = vector.load %arg3[%c3, %c0_5] : memref<4x512xf32, #tpu.memory_space<vmem>>, vector<1x512xf32>
    %23 = vector.shape_cast %22 : vector<1x512xf32> to vector<1x512xf32>
    %24 = vector.broadcast %23 : vector<1x512xf32> to vector<2x512xf32>
    %25 = arith.select %21, %24, %19 : vector<2x512xi1>, vector<2x512xf32>
    %c0_6 = arith.constant 0 : index
    %c0_7 = arith.constant 0 : index
    %26 = vector.load %arg4[%c0_6, %c0_7] : memref<1x512xf32, #tpu.memory_space<vmem>>, vector<1x512xf32>
    %27 = vector.broadcast %26 : vector<1x512xf32> to vector<2x512xf32>
    %28 = arith.addf %25, %27 : vector<2x512xf32>
    %c0_8 = arith.constant 0 : index
    %c0_9 = arith.constant 0 : index
    %29 = vector.load %arg5[%c0_8, %c0_9] : memref<2x512xf32, #tpu.memory_space<vmem>>, vector<2x512xf32>
    tpu.vector_store %arg5[%c0_8, %c0_9], %28 {strides = array<i32>} : memref<2x512xf32, #tpu.memory_space<vmem>>, vector<2x512xf32>,
    return
  }
  func.func @transform_0(%arg0: i32, %arg1: memref<1xi32, #tpu.memory_space<smem>>) -> (i32, i32) {
    %c0_i32 = arith.constant 0 : i32
    %c0_i32_0 = arith.constant 0 : i32
    return %arg0, %c0_i32 : i32, i32
  }
  func.func @transform_1(%arg0: i32, %arg1: memref<1xi32, #tpu.memory_space<smem>>) -> (i32, i32) {
    %c0_i32 = arith.constant 0 : i32
    %c0_i32_0 = arith.constant 0 : i32
    %c0_i32_1 = arith.constant 0 : i32
    return %c0_i32, %c0_i32_0 : i32, i32
  }
  func.func @transform_2(%arg0: i32, %arg1: memref<1xi32, #tpu.memory_space<smem>>) -> (i32, i32) {
    %c0_i32 = arith.constant 0 : i32
    %c0_i32_0 = arith.constant 0 : i32
    %c0_i32_1 = arith.constant 0 : i32
    return %c0_i32, %c0_i32_0 : i32, i32
  }
  func.func @transform_3(%arg0: i32, %arg1: memref<1xi32, #tpu.memory_space<smem>>) -> (i32, i32) {
    %c0_i32 = arith.constant 0 : i32
    %c0_i32_0 = arith.constant 0 : i32
    return %arg0, %c0_i32 : i32, i32
  }
}

</mosaic_0001>

<llo_original>
// kernel: tpu_custom_call.1
$region0: #{tpu_custom_call.1}
  #allocation0 [shape = 'u32[]', space=smem, size = 0x4, offset = 0x4, fixed_abs, tag = 'smem constant byte address 0x4 - core index']
  #allocation1 [shape = 'u32[144,128]{1,0:T(1,128)}', space=vmem, size = 0x12000, scoped, tag = 'internal scratch']
  #allocation2 [shape = 's32[1]{0}', space=sflag, size = 0x4, scoped, tag = 'scoped memory for tpu_custom_call.1']
  #allocation3 [shape = 's32[1]{0:T(128)S(6)}', space=smem, size = 0x200, scoped, tag = 'prefetched SMEM operand 0']
  %s0 = inlined_call_operand.<no memory space> [shape: s32[1], index: 0, kind: input, shape index: {}]
  %s1 = inlined_call_operand.hbm [shape: s32[2,512], index: 1, kind: input, shape index: {}]
  %s2 = inlined_call_operand.hbm [shape: f32[4,512], index: 2, kind: input, shape index: {}]
  %s3 = inlined_call_operand.vmem [shape: f32[1,512], index: 3, kind: input, shape index: {}]
  %s4 = inlined_call_operand.hbm [shape: f32[2,512], index: 4, kind: output, shape index: {}]
  %s5 = sld [smem:[#allocation0]]
  $region30: #{tpu_custom_call.1} parent=0
    _
  %s7 = ssub.s32 1, %s5
  %s8 = scalar_select 0, %s7, %s5
  %9 = sst [smem:[#allocation3]] %s0
  $region1: #{tpu_custom_call.1} parent=0
    #allocation4 [shape = 'u8[4096]{0}', space=vmem, size = 0x1000, scoped, tag = 'input window, operand 1, single buffered']
    #allocation5 [shape = 's32[1]{0}', space=sflag, size = 0x4, scoped, tag = 'scoped memory for tpu_custom_call.1']
    #allocation6 [shape = 's32[1]{0}', space=sflag, size = 0x4, scoped, tag = 'scoped memory for tpu_custom_call.1']
    #allocation7 [shape = 'u8[8192]{0}', space=vmem, size = 0x2000, scoped, tag = 'input window, operand 2, single buffered']
    #allocation8 [shape = 's32[1]{0}', space=sflag, size = 0x4, scoped, tag = 'scoped memory for tpu_custom_call.1']
    #allocation9 [shape = 'u8[4096]{0}', space=vmem, size = 0x1000, scoped, tag = 'output window, operand 0, single buffered']
    %10 = vsyncpa [#allocation5], 0
    %11 = vsyncpa [#allocation8], 0
    %12 = vsyncpa [#allocation6], 0
    // Predicated region
    $region2: #{tpu_custom_call.1} parent=1 // pred_check
      _
    $region3: #{tpu_custom_call.1} parent=1 // pred_check_branch
      %14 = sbr.rel (0) target = $region5
    $region4: #{tpu_custom_call.1} parent=1 // pred_region
      %s16 = ssub.s32 128, 128
      %17 = vsyncadd [#allocation5], %s16
      %s19 = sshll.u32 [#allocation4], 4
      %s20 = int_to_ptr.vmem [resolvable:$true] %s19
      %22 = dma.hbm_to_vmem [thread:$0]  %s1, 128, %s20, [#allocation5]
    $region5: #{tpu_custom_call.1} parent=1 // pred_fallthru
      _
    // Predicated region
    $region6: #{tpu_custom_call.1} parent=1 // pred_check
      _
    $region7: #{tpu_custom_call.1} parent=1 // pred_check_branch
      %24 = sbr.rel (0) target = $region9
    $region8: #{tpu_custom_call.1} parent=1 // pred_region
      %s26 = ssub.s32 256, 256
      %27 = vsyncadd [#allocation8], %s26
      %s29 = sshll.u32 [#allocation7], 4
      %s30 = int_to_ptr.vmem [resolvable:$true] %s29
      %32 = dma.hbm_to_vmem [thread:$0]  %s2, 256, %s30, [#allocation8]
    $region9: #{tpu_custom_call.1} parent=1 // pred_fallthru
      _
    // Predicated region
    $region10: #{tpu_custom_call.1} parent=1 // pred_check
      _
    $region11: #{tpu_custom_call.1} parent=1 // pred_check_branch
      %34 = sbr.rel (0) target = $region13
    $region12: #{tpu_custom_call.1} parent=1 // pred_region
      _
    $region13: #{tpu_custom_call.1} parent=1 // pred_fallthru
      _
    // Predicated region
    $region14: #{tpu_custom_call.1} parent=1 // pred_check
      _
    $region15: #{tpu_custom_call.1} parent=1 // pred_check_branch
      %36 = sbr.rel (0) target = $region17
    $region16: #{tpu_custom_call.1} parent=1 // pred_region
      %37 = dma.done [#allocation5], 128
    $region17: #{tpu_custom_call.1} parent=1 // pred_fallthru
      _
    // Predicated region
    $region18: #{tpu_custom_call.1} parent=1 // pred_check
      _
    $region19: #{tpu_custom_call.1} parent=1 // pred_check_branch
      %39 = sbr.rel (0) target = $region21
    $region20: #{tpu_custom_call.1} parent=1 // pred_region
      %40 = dma.done [#allocation8], 256
    $region21: #{tpu_custom_call.1} parent=1 // pred_fallthru
      _
    %v41 = vld [vmem:[#allocation4] sm:$0xff]
    %vm42 = vcmp.eq.s32.totalorder %v41, 0
    %v43 = vld [vmem:[#allocation7] ss:$4 sm:$0xf]
    %v45 = vlaneseq
    %v46 = vshrl.u32 %v45, 7
    %v47 = vsub.s32 0, %v46
    %v48 = vrot.slane %v43, %v47
    %v49 = vlaneseq
    %v50 = vshrl.u32 %v49, 7
    %v51 = vsub.s32 1, %v50
    %v52 = vrot.slane %v43, %v51
    %v53 = vlaneseq
    %v54 = vshrl.u32 %v53, 7
    %v55 = vsub.s32 2, %v54
    %v56 = vrot.slane %v43, %v55
    %v57 = vlaneseq
    %v58 = vshrl.u32 %v57, 7
    %v59 = vsub.s32 3, %v58
    %v60 = vrot.slane %v43, %v59
    %v61 = vcombine.low %v48, %v52
    %v62 = vcombine.low %v56, %v60
    %v64 = vunpack.c.l.s4 1983009808
    %v65 = vunpack.c.0.s8 %v64
    %v66 = vlaneseq
    %v67 = vshrl.u32 %v66, 7
    %v68 = vsub.s32 %v65, %v67
    %v69 = vrot.slane %v61, %v68
    %v71 = vunpack.c.l.s4 1983009808
    %v72 = vunpack.c.0.s8 %v71
    %v73 = vlaneseq
    %v74 = vshrl.u32 %v73, 7
    %v75 = vsub.s32 %v72, %v74
    %v76 = vrot.slane %v62, %v75
    %v77 = vcombine.low %v69, %v76
    %v79 = vsel %vm42, %v77, 0.0
    %vm80 = vcmp.eq.s32.totalorder %v41, 1
    %s81 = scalar_lea.vmem [#allocation7], 1
    %v82 = vld [vmem:[%s81] ss:$4 sm:$0xf]
    %v84 = vlaneseq
    %v85 = vshrl.u32 %v84, 7
    %v86 = vsub.s32 0, %v85
    %v87 = vrot.slane %v82, %v86
    %v88 = vlaneseq
    %v89 = vshrl.u32 %v88, 7
    %v90 = vsub.s32 1, %v89
    %v91 = vrot.slane %v82, %v90
    %v92 = vlaneseq
    %v93 = vshrl.u32 %v92, 7
    %v94 = vsub.s32 2, %v93
    %v95 = vrot.slane %v82, %v94
    %v96 = vlaneseq
    %v97 = vshrl.u32 %v96, 7
    %v98 = vsub.s32 3, %v97
    %v99 = vrot.slane %v82, %v98
    %v100 = vcombine.low %v87, %v91
    %v101 = vcombine.low %v95, %v99
    %v103 = vunpack.c.l.s4 1983009808
    %v104 = vunpack.c.0.s8 %v103
    %v105 = vlaneseq
    %v106 = vshrl.u32 %v105, 7
    %v107 = vsub.s32 %v104, %v106
    %v108 = vrot.slane %v100, %v107
    %v110 = vunpack.c.l.s4 1983009808
    %v111 = vunpack.c.0.s8 %v110
    %v112 = vlaneseq
    %v113 = vshrl.u32 %v112, 7
    %v114 = vsub.s32 %v111, %v113
    %v115 = vrot.slane %v101, %v114
    %v116 = vcombine.low %v108, %v115
    %v118 = vsel %vm80, %v116, %v79
    %vm119 = vcmp.eq.s32.totalorder %v41, 2
    %s120 = scalar_lea.vmem [#allocation7], 2
    %v121 = vld [vmem:[%s120] ss:$4 sm:$0xf]
    %v123 = vlaneseq
    %v124 = vshrl.u32 %v123, 7
    %v125 = vsub.s32 0, %v124
    %v126 = vrot.slane %v121, %v125
    %v127 = vlaneseq
    %v128 = vshrl.u32 %v127, 7
    %v129 = vsub.s32 1, %v128
    %v130 = vrot.slane %v121, %v129
    %v131 = vlaneseq
    %v132 = vshrl.u32 %v131, 7
    %v133 = vsub.s32 2, %v132
    %v134 = vrot.slane %v121, %v133
    %v135 = vlaneseq
    %v136 = vshrl.u32 %v135, 7
    %v137 = vsub.s32 3, %v136
    %v138 = vrot.slane %v121, %v137
    %v139 = vcombine.low %v126, %v130
    %v140 = vcombine.low %v134, %v138
    %v142 = vunpack.c.l.s4 1983009808
    %v143 = vunpack.c.0.s8 %v142
    %v144 = vlaneseq
    %v145 = vshrl.u32 %v144, 7
    %v146 = vsub.s32 %v143, %v145
    %v147 = vrot.slane %v139, %v146
    %v149 = vunpack.c.l.s4 1983009808
    %v150 = vunpack.c.0.s8 %v149
    %v151 = vlaneseq
    %v152 = vshrl.u32 %v151, 7
    %v153 = vsub.s32 %v150, %v152
    %v154 = vrot.slane %v140, %v153
    %v155 = vcombine.low %v147, %v154
    %v157 = vsel %vm119, %v155, %v118
    %vm158 = vcmp.eq.s32.totalorder %v41, 3
    %s159 = scalar_lea.vmem [#allocation7], 3
    %v160 = vld [vmem:[%s159] ss:$4 sm:$0xf]
    %v162 = vlaneseq
    %v163 = vshrl.u32 %v162, 7
    %v164 = vsub.s32 0, %v163
    %v165 = vrot.slane %v160, %v164
    %v166 = vlaneseq
    %v167 = vshrl.u32 %v166, 7
    %v168 = vsub.s32 1, %v167
    %v169 = vrot.slane %v160, %v168
    %v170 = vlaneseq
    %v171 = vshrl.u32 %v170, 7
    %v172 = vsub.s32 2, %v171
    %v173 = vrot.slane %v160, %v172
    %v174 = vlaneseq
    %v175 = vshrl.u32 %v174, 7
    %v176 = vsub.s32 3, %v175
    %v177 = vrot.slane %v160, %v176
    %v178 = vcombine.low %v165, %v169
    %v179 = vcombine.low %v173, %v177
    %v181 = vunpack.c.l.s4 1983009808
    %v182 = vunpack.c.0.s8 %v181
    %v183 = vlaneseq
    %v184 = vshrl.u32 %v183, 7
    %v185 = vsub.s32 %v182, %v184
    %v186 = vrot.slane %v178, %v185
    %v188 = vunpack.c.l.s4 1983009808
    %v189 = vunpack.c.0.s8 %v188
    %v190 = vlaneseq
    %v191 = vshrl.u32 %v190, 7
    %v192 = vsub.s32 %v189, %v191
    %v193 = vrot.slane %v179, %v192
    %v194 = vcombine.low %v186, %v193
    %v196 = vsel %vm158, %v194, %v157
    %v197 = vld [vmem:[%s3] sm:$0xf]
    %v199 = vlaneseq
    %v200 = vshrl.u32 %v199, 7
    %v201 = vsub.s32 0, %v200
    %v202 = vrot.slane %v197, %v201
    %v203 = vlaneseq
    %v204 = vshrl.u32 %v203, 7
    %v205 = vsub.s32 1, %v204
    %v206 = vrot.slane %v197, %v205
    %v207 = vlaneseq
    %v208 = vshrl.u32 %v207, 7
    %v209 = vsub.s32 2, %v208
    %v210 = vrot.slane %v197, %v209
    %v211 = vlaneseq
    %v212 = vshrl.u32 %v211, 7
    %v213 = vsub.s32 3, %v212
    %v214 = vrot.slane %v197, %v213
    %v215 = vcombine.low %v202, %v206
    %v216 = vcombine.low %v210, %v214
    %v218 = vunpack.c.l.s4 1983009808
    %v219 = vunpack.c.0.s8 %v218
    %v220 = vlaneseq
    %v221 = vshrl.u32 %v220, 7
    %v222 = vsub.s32 %v219, %v221
    %v223 = vrot.slane %v215, %v222
    %v225 = vunpack.c.l.s4 1983009808
    %v226 = vunpack.c.0.s8 %v225
    %v227 = vlaneseq
    %v228 = vshrl.u32 %v227, 7
    %v229 = vsub.s32 %v226, %v228
    %v230 = vrot.slane %v216, %v229
    %v231 = vcombine.low %v223, %v230
    %v233 = vadd.f32 %v196, %v231
    %234 = vst [vmem:[#allocation9] sm:$0xff] %v233
    // Predicated region
    $region22: #{tpu_custom_call.1} parent=1 // pred_check
      _
    $region23: #{tpu_custom_call.1} parent=1 // pred_check_branch
      %236 = sbr.rel (0) target = $region25
    $region24: #{tpu_custom_call.1} parent=1 // pred_region
      %s238 = ssub.s32 128, 128
      %239 = vsyncadd [#allocation6], %s238
      %s241 = sshll.u32 [#allocation9], 4
      %s242 = int_to_ptr.vmem [resolvable:$true] %s241
      %244 = dma.vmem_to_hbm [thread:$0]  %s242, 128, %s4, [#allocation6]
    $region25: #{tpu_custom_call.1} parent=1 // pred_fallthru
      _
    // Predicated region
    $region26: #{tpu_custom_call.1} parent=1 // pred_check
      _
    $region27: #{tpu_custom_call.1} parent=1 // pred_check_branch
      %246 = sbr.rel (0) target = $region29
    $region28: #{tpu_custom_call.1} parent=1 // pred_region
      %247 = dma.done [#allocation6], 128
    $region29: #{tpu_custom_call.1} parent=1 // pred_fallthru
      _
    %248 = vsyncpa [#allocation5], 1
    %249 = vsyncpa [#allocation8], 1
    %250 = vsyncpa [#allocation6], 1

</llo_original>
